<compile_context>
chip_gen: v7x
topology: tpu7x:2x2x1
jax: 0.10.0
libtpu: 0.0.40
codegen_flags: <defaults>
</compile_context>

<pallas_src>
import functools

import jax
import jax.numpy as jnp
from jax import lax
from jax.experimental import pallas as pl
from jax.experimental.pallas import tpu as pltpu


# ----------------------------- Pallas kernels ------------------------------

def _conv3x3_kernel(x_ref, w_ref, b_ref, m_ref, o_ref, *, W, relu):
    """3x3 conv as a single fused im2col matmul over one image.

    x_ref: (1, L, Cin)    zero-padded, row-major flattened "framed" image,
                          L = (H+2)*(W+2) + 2 (one guard element on each end).
    w_ref: (9*Cin, Cout)  HWIO weights with BN scale pre-folded, flattened.
    b_ref: (1, Cout)      bias with BN shift pre-folded (float32).
    m_ref: (P, 1)         1.0 on real output columns, 0.0 on the two frame
                          columns of each row (keeps the frame exactly zero).
    o_ref: (1, P, Cout)   framed output, P = H*(W+2).
    """
    Wf = W + 2
    P = o_ref.shape[1]
    # Nine statically shifted views of the padded input, concatenated on the
    # lane axis -> im2col patches live only in VMEM, never in HBM.
    taps = [x_ref[0, kh * Wf + kw: kh * Wf + kw + P, :]
            for kh in range(3) for kw in range(3)]
    patches = jnp.concatenate(taps, axis=-1)                 # (P, 9*Cin)
    acc = jnp.dot(patches, w_ref[...],
                  preferred_element_type=jnp.float32)        # one MXU matmul
    acc = acc + b_ref[...]
    if relu:
        acc = jnp.maximum(acc, 0.0)
    acc = acc * m_ref[...]                                   # zero frame cols
    o_ref[0] = acc.astype(o_ref.dtype)


def _maxpool2x2_kernel(x_ref, o_ref, i_ref):
    """2x2 / stride-2 max pool with a 2-bit argmax code (int8).

    x_ref: (1, Hp, 2, Wp, 2*C)  free reshape of the NHWC input (read once)
    o_ref: (1, Hp, Wp, C)       pooled values (== F.max_pool2d output)
    i_ref: (1, Hp, Wp, C) int8  argmax in {0,1,2,3} = 2*dh + dw, first
                                occurrence wins on exact ties (stand-in for
                                return_indices; PyTorch's tie order is
                                implementation-defined).
    """
    C = o_ref.shape[-1]
    v = x_ref[0]                          # (Hp, 2, Wp, 2C)
    r0, r1 = v[:, 0], v[:, 1]             # even / odd input rows
    a, b = r0[:, :, :C], r0[:, :, C:]     # (dh, dw) = (0,0), (0,1)
    c, d = r1[:, :, :C], r1[:, :, C:]     # (dh, dw) = (1,0), (1,1)
    mx = jnp.maximum(jnp.maximum(a, b), jnp.maximum(c, d))
    o_ref[0] = mx
    idx = jnp.where(a == mx, 0,
          jnp.where(b == mx, 1,
          jnp.where(c == mx, 2, 3)))
    i_ref[0] = idx.astype(jnp.int8)


def _unpool2x2_kernel(x_ref, i_ref, o_ref):
    """Max-unpool: route each pooled value to its recorded 2x2 position.

    x_ref: (1, Hp, Wp, C); i_ref: (1, Hp, Wp, C) int8;
    o_ref: (1, Hp, 2, Wp, 2*C)  -- free reshape of the (N, 2Hp, 2Wp, C) output,
                                   written interleaved directly by the kernel.
    """
    C = x_ref.shape[-1]
    x = x_ref[0]
    idx = i_ref[0].astype(jnp.int32)
    t0 = jnp.where(idx == 0, x, 0).astype(x.dtype)
    t1 = jnp.where(idx == 1, x, 0).astype(x.dtype)
    t2 = jnp.where(idx == 2, x, 0).astype(x.dtype)
    t3 = jnp.where(idx == 3, x, 0).astype(x.dtype)
    o_ref[0, :, 0, :, :] = jnp.concatenate([t0, t1], axis=-1)
    o_ref[0, :, 1, :, :] = jnp.concatenate([t2, t3], axis=-1)


# ------------------------------ op wrappers --------------------------------

def _conv3x3_framed(af, H, W, w, b, relu, dt):
    """One 3x3 conv on the framed flat activation.

    af: (N, H*(W+2), Cin) in dtype dt; each row is [W real cols, 2 zero cols].
    w:  (3, 3, Cin, Cout) float32 (BN scale already folded in).
    b:  (Cout,)           float32 (BN shift already folded in).
    Returns (N, H*(W+2), Cout) framed output in dtype dt.
    """
    N, _, Cin = af.shape
    Cout = w.shape[-1]
    Wf = W + 2
    P = H * Wf
    L = (H + 2) * Wf + 2
    # One zero row top/bottom plus a 1-element guard on each end, so every tap
    # slice (offset kh*Wf + kw, length P) is in bounds and reads zeros at the
    # image border.
    pf = jnp.pad(af, ((0, 0), (Wf + 1, Wf + 1), (0, 0)))
    wf = w.reshape(9 * Cin, Cout).astype(dt)
    b2 = b.reshape(1, Cout).astype(jnp.float32)
    col = jnp.arange(P, dtype=jnp.int32) % Wf
    mask = (col < W).astype(jnp.float32).reshape(P, 1)

    return pl.pallas_call(
        functools.partial(_conv3x3_kernel, W=W, relu=relu),
        out_shape=jax.ShapeDtypeStruct((N, P, Cout), dt),
        grid=(N,),
        in_specs=[
            pl.BlockSpec((1, L, Cin), lambda n: (n, 0, 0)),
            pl.BlockSpec((9 * Cin, Cout), lambda n: (0, 0)),
            pl.BlockSpec((1, Cout), lambda n: (0, 0)),
            pl.BlockSpec((P, 1), lambda n: (0, 0)),
        ],
        out_specs=pl.BlockSpec((1, P, Cout), lambda n: (n, 0, 0)),
        compiler_params=pltpu.CompilerParams(
            dimension_semantics=("parallel",)),
    )(pf, wf, b2, mask)


def conv_stack(x, layers, relus, dt):
    """Chain of SingleBlock / OutputBlock convs (Conv3x3 [+BN] [+ReLU]).

    x: (N, H, W, Cin) NHWC.  Between convs the activation stays in the framed
    flat layout, so the only XLA op per conv is a 1-D zero pad.
    """
    N, H, W, _ = x.shape
    Wf = W + 2
    af = jnp.pad(x, ((0, 0), (0, 0), (0, 2), (0, 0))).reshape(N, H * Wf, -1)
    af = af.astype(dt)
    for p, relu in zip(layers, relus):
        # Fold eval-mode BatchNorm into the conv:
        #   y = (conv(x) + b) * s + t  ==>  w' = w*s,  b' = b*s + t
        # (t = beta - running_mean*s already absorbs the mean term).
        w = p["w"] * p["scale"]
        b = p["b"] * p["scale"] + p["shift"]
        af = _conv3x3_framed(af, H, W, w, b, relu, dt)
    return af.reshape(N, H, Wf, -1)[:, :, :W, :]


def maxpool2x2_with_idx(x):
    """F.max_pool2d(kernel=2, stride=2, return_indices=True) equivalent."""
    N, H, W, C = x.shape
    Hp, Wp = H // 2, W // 2
    xr = x.reshape(N, Hp, 2, Wp, 2 * C)            # free row-major reshape
    return pl.pallas_call(
        _maxpool2x2_kernel,
        out_shape=(jax.ShapeDtypeStruct((N, Hp, Wp, C), x.dtype),
                   jax.ShapeDtypeStruct((N, Hp, Wp, C), jnp.int8)),
        grid=(N,),
        in_specs=[pl.BlockSpec((1, Hp, 2, Wp, 2 * C),
                               lambda n: (n, 0, 0, 0, 0))],
        out_specs=(pl.BlockSpec((1, Hp, Wp, C), lambda n: (n, 0, 0, 0)),
                   pl.BlockSpec((1, Hp, Wp, C), lambda n: (n, 0, 0, 0))),
        compiler_params=pltpu.CompilerParams(
            dimension_semantics=("parallel",)),
    )(xr)


def max_unpool2x2(x, idx):
    """F.max_unpool2d(kernel=2, stride=2) equivalent (idx carries the argmax)."""
    N, Hp, Wp, C = x.shape
    out = pl.pallas_call(
        _unpool2x2_kernel,
        out_shape=jax.ShapeDtypeStruct((N, Hp, 2, Wp, 2 * C), x.dtype),
        grid=(N,),
        in_specs=[pl.BlockSpec((1, Hp, Wp, C), lambda n: (n, 0, 0, 0)),
                  pl.BlockSpec((1, Hp, Wp, C), lambda n: (n, 0, 0, 0))],
        out_specs=pl.BlockSpec((1, Hp, 2, Wp, 2 * C),
                               lambda n: (n, 0, 0, 0, 0)),
        compiler_params=pltpu.CompilerParams(
            dimension_semantics=("parallel",)),
    )(x, idx)
    return out.reshape(N, 2 * Hp, 2 * Wp, C)       # free row-major reshape


# ------------------------------ SegNet model --------------------------------

N_BLOCKS = [2, 2, 3, 3, 3]


def _make_conv_params(key, cin, cout, bn=True):
    k1, k2 = jax.random.split(key)
    w = jax.random.normal(k1, (3, 3, cin, cout), jnp.float32) / jnp.sqrt(9.0 * cin)
    b = 0.01 * jax.random.normal(k2, (cout,), jnp.float32)
    if bn:
        # BatchNorm2d, eval mode, fresh running stats:
        #   gamma=1, beta=0, running_mean=0, running_var=1.
        eps = 1e-5
        scale = jnp.ones((cout,), jnp.float32) / jnp.sqrt(1.0 + eps)
        shift = jnp.zeros((cout,), jnp.float32)    # beta - mean*scale
    else:
        scale = jnp.ones((cout,), jnp.float32)
        shift = jnp.zeros((cout,), jnp.float32)
    return {"w": w, "b": b, "scale": scale, "shift": shift}


def init_segnet_params(key, input_dim, output_dim, filters):
    enc_f = [input_dim] + list(filters)
    dec_f = list(reversed(filters))
    n_rev = list(reversed(N_BLOCKS))
    keys = iter(jax.random.split(key, 64))

    encoder = []
    for i, nb in enumerate(N_BLOCKS):
        chans = [(enc_f[i], enc_f[i + 1])] + [(enc_f[i + 1], enc_f[i + 1])] * (nb - 1)
        encoder.append([_make_conv_params(next(keys), ci, co) for ci, co in chans])

    decoder = []
    for i in range(len(n_rev) - 1):
        nb = n_rev[i]
        chans = [(dec_f[i], dec_f[i])] * (nb - 1) + [(dec_f[i], dec_f[i + 1])]
        decoder.append([_make_conv_params(next(keys), ci, co) for ci, co in chans])

    output = [_make_conv_params(next(keys), dec_f[-1], dec_f[-1], bn=True),
              _make_conv_params(next(keys), dec_f[-1], output_dim, bn=False)]
    return {"encoder": encoder, "decoder": decoder, "output": output}


def segnet_forward(params, x_nchw, compute_dtype=jnp.bfloat16):
    # NCHW (PyTorch convention) -> NHWC; bf16 activations for the MXU
    # (accumulation and the epilogue stay in f32 inside the kernels).
    x = jnp.transpose(x_nchw, (0, 2, 3, 1)).astype(compute_dtype)

    pool_idx = []
    for blk in params["encoder"]:
        x = conv_stack(x, blk, [True] * len(blk), compute_dtype)
        x, idx = maxpool2x2_with_idx(x)
        pool_idx.append(idx)

    pool_idx = pool_idx[::-1]
    for blk, idx in zip(params["decoder"], pool_idx[:-1]):
        x = max_unpool2x2(x, idx)
        x = conv_stack(x, blk, [True] * len(blk), compute_dtype)

    x = max_unpool2x2(x, pool_idx[-1])
    # output_layer = SingleBlock (BN + ReLU) + OutputBlock (plain conv).
    x = conv_stack(x, params["output"], [True, False], compute_dtype)
    return jnp.transpose(x, (0, 3, 1, 2)).astype(jnp.float32)   # back to NCHW


# -------------------------- pure-JAX references -----------------------------

def _conv_stack_ref(x, layers, relus):
    y = x
    for p, relu in zip(layers, relus):
        y = lax.conv_general_dilated(
            y, p["w"], (1, 1), ((1, 1), (1, 1)),
            dimension_numbers=("NHWC", "HWIO", "NHWC"),
            precision=lax.Precision.HIGHEST)
        y = (y + p["b"]) * p["scale"] + p["shift"]
        if relu:
            y = jnp.maximum(y, 0.0)
    return y


def _pool_ref(x):
    N, H, W, C = x.shape
    Hp, Wp = H // 2, W // 2
    r = x.reshape(N, Hp, 2, Wp, 2, C)
    a, b = r[:, :, 0, :, 0, :], r[:, :, 0, :, 1, :]
    c, d = r[:, :, 1, :, 0, :], r[:, :, 1, :, 1, :]
    mx = jnp.maximum(jnp.maximum(a, b), jnp.maximum(c, d))
    idx = jnp.where(a == mx, 0, jnp.where(b == mx, 1, jnp.where(c == mx, 2, 3)))
    return mx, idx


def _unpool_ref(x, idx):
    N, Hp, Wp, C = x.shape
    taps = [jnp.where(idx == k, x, 0.0) for k in range(4)]
    r = jnp.stack([jnp.stack([taps[0], taps[1]], axis=3),
                   jnp.stack([taps[2], taps[3]], axis=3)], axis=2)
    return r.reshape(N, 2 * Hp, 2 * Wp, C)


# ---------------------------------- main ------------------------------------

if __name__ == "__main__":
    key = jax.random.PRNGKey(0)
    k_cx, k_cw, k_pool, kp, kx = jax.random.split(key, 5)

    # --- check 1: framed fused-matmul conv chain vs lax.conv reference (f32) --
    xc = jax.random.normal(k_cx, (2, 8, 8, 6), jnp.float32)
    layers = []
    for i, (ci, co) in enumerate([(6, 16), (16, 12)]):
        ka, kb, kc, kd = jax.random.split(jax.random.fold_in(k_cw, i), 4)
        layers.append({
            "w": jax.random.normal(ka, (3, 3, ci, co), jnp.float32) / jnp.sqrt(9.0 * ci),
            "b": 0.1 * jax.random.normal(kb, (co,), jnp.float32),
            "scale": 1.0 + 0.1 * jax.random.normal(kc, (co,), jnp.float32),
            "shift": 0.1 * jax.random.normal(kd, (co,), jnp.float32),
        })
    relus = [True, False]
    got = conv_stack(xc, layers, relus, jnp.float32)
    ref = _conv_stack_ref(xc, layers, relus)
    assert got.shape == ref.shape
    assert bool(jnp.allclose(got, ref, rtol=2e-2, atol=2e-2)), \
        float(jnp.max(jnp.abs(got - ref)))

    # --- check 2: pool / unpool kernels vs pure-jnp reference ---------------
    xp_ = jax.random.normal(k_pool, (2, 8, 8, 16), jnp.float32)
    pooled, idx = maxpool2x2_with_idx(xp_)
    pr, ir = _pool_ref(xp_)
    assert bool(jnp.array_equal(pooled, pr))
    assert bool(jnp.array_equal(idx.astype(jnp.int32), ir))
    up = max_unpool2x2(pooled, idx)
    assert bool(jnp.array_equal(up, _unpool_ref(pr, ir)))

    # --- full SegNet forward (bf16 activations) ------------------------------
    INPUT_DIM, OUTPUT_DIM = 4, 3
    FILTERS = [8, 16, 16, 32, 32]      # scaled-down [64, 128, 256, 512, 512]
    BATCH, SPATIAL = 2, 32             # spatial must be divisible by 2**5

    params = init_segnet_params(kp, INPUT_DIM, OUTPUT_DIM, FILTERS)
    x = jax.random.normal(kx, (BATCH, INPUT_DIM, SPATIAL, SPATIAL), jnp.float32)

    fwd = jax.jit(lambda p, v: segnet_forward(p, v, jnp.bfloat16))
    out = fwd(params, x)
    jax.block_until_ready(out)
    assert out.shape == (BATCH, OUTPUT_DIM, SPATIAL, SPATIAL), out.shape
    assert bool(jnp.all(jnp.isfinite(out)))
    print("KERNEL_OK")
</pallas_src>

<mosaic_0001>
module attributes {stable_mosaic.version = 11 : i64} {
  func.func @_conv3x3_kernel(%arg0: i32, %arg1: memref<1x102x6xf32, #tpu.memory_space<vmem>>, %arg2: memref<54x16xf32, #tpu.memory_space<vmem>>, %arg3: memref<1x16xf32, #tpu.memory_space<vmem>>, %arg4: memref<80x1xf32, #tpu.memory_space<vmem>>, %arg5: memref<1x80x16xf32, #tpu.memory_space<vmem>>) attributes {dimension_semantics = [#tpu.dimension_semantics<parallel>], iteration_bounds = array<i64: 2>, scalar_prefetch = 0 : i64, scratch_operands = 0 : i64, tpu.core_type = #tpu.core_type<tc>, window_params = [{transform_indices = @transform_0, window_bounds = array<i64: 1, 102, 6>}, {pipeline_mode = #tpu.pipeline_mode<synchronous>, transform_indices = @transform_1, window_bounds = array<i64: 54, 16>}, {pipeline_mode = #tpu.pipeline_mode<synchronous>, transform_indices = @transform_2, window_bounds = array<i64: 1, 16>}, {pipeline_mode = #tpu.pipeline_mode<synchronous>, transform_indices = @transform_3, window_bounds = array<i64: 80, 1>}, {transform_indices = @transform_4, window_bounds = array<i64: 1, 80, 16>}]} {
    %c0 = arith.constant 0 : index
    %c0_0 = arith.constant 0 : index
    %c0_1 = arith.constant 0 : index
    %0 = vector.load %arg1[%c0, %c0_0, %c0_1] : memref<1x102x6xf32, #tpu.memory_space<vmem>>, vector<1x80x6xf32>
    %1 = vector.shape_cast %0 : vector<1x80x6xf32> to vector<80x6xf32>
    %c0_2 = arith.constant 0 : index
    %c1 = arith.constant 1 : index
    %c0_3 = arith.constant 0 : index
    %2 = vector.load %arg1[%c0_2, %c1, %c0_3] : memref<1x102x6xf32, #tpu.memory_space<vmem>>, vector<1x80x6xf32>
    %3 = vector.shape_cast %2 : vector<1x80x6xf32> to vector<80x6xf32>
    %c0_4 = arith.constant 0 : index
    %c2 = arith.constant 2 : index
    %c0_5 = arith.constant 0 : index
    %4 = vector.load %arg1[%c0_4, %c2, %c0_5] : memref<1x102x6xf32, #tpu.memory_space<vmem>>, vector<1x80x6xf32>
    %5 = vector.shape_cast %4 : vector<1x80x6xf32> to vector<80x6xf32>
    %c0_6 = arith.constant 0 : index
    %c10 = arith.constant 10 : index
    %c0_7 = arith.constant 0 : index
    %6 = vector.load %arg1[%c0_6, %c10, %c0_7] : memref<1x102x6xf32, #tpu.memory_space<vmem>>, vector<1x80x6xf32>
    %7 = vector.shape_cast %6 : vector<1x80x6xf32> to vector<80x6xf32>
    %c0_8 = arith.constant 0 : index
    %c11 = arith.constant 11 : index
    %c0_9 = arith.constant 0 : index
    %8 = vector.load %arg1[%c0_8, %c11, %c0_9] : memref<1x102x6xf32, #tpu.memory_space<vmem>>, vector<1x80x6xf32>
    %9 = vector.shape_cast %8 : vector<1x80x6xf32> to vector<80x6xf32>
    %c0_10 = arith.constant 0 : index
    %c12 = arith.constant 12 : index
    %c0_11 = arith.constant 0 : index
    %10 = vector.load %arg1[%c0_10, %c12, %c0_11] : memref<1x102x6xf32, #tpu.memory_space<vmem>>, vector<1x80x6xf32>
    %11 = vector.shape_cast %10 : vector<1x80x6xf32> to vector<80x6xf32>
    %c0_12 = arith.constant 0 : index
    %c20 = arith.constant 20 : index
    %c0_13 = arith.constant 0 : index
    %12 = vector.load %arg1[%c0_12, %c20, %c0_13] : memref<1x102x6xf32, #tpu.memory_space<vmem>>, vector<1x80x6xf32>
    %13 = vector.shape_cast %12 : vector<1x80x6xf32> to vector<80x6xf32>
    %c0_14 = arith.constant 0 : index
    %c21 = arith.constant 21 : index
    %c0_15 = arith.constant 0 : index
    %14 = vector.load %arg1[%c0_14, %c21, %c0_15] : memref<1x102x6xf32, #tpu.memory_space<vmem>>, vector<1x80x6xf32>
    %15 = vector.shape_cast %14 : vector<1x80x6xf32> to vector<80x6xf32>
    %c0_16 = arith.constant 0 : index
    %c22 = arith.constant 22 : index
    %c0_17 = arith.constant 0 : index
    %16 = vector.load %arg1[%c0_16, %c22, %c0_17] : memref<1x102x6xf32, #tpu.memory_space<vmem>>, vector<1x80x6xf32>
    %17 = vector.shape_cast %16 : vector<1x80x6xf32> to vector<80x6xf32>
    %18 = tpu.concatenate %1, %3, %5, %7, %9, %11, %13, %15, %17 in 1 : vector<80x6xf32>, vector<80x6xf32>, vector<80x6xf32>, vector<80x6xf32>, vector<80x6xf32>, vector<80x6xf32>, vector<80x6xf32>, vector<80x6xf32>, vector<80x6xf32> -> vector<80x54xf32>
    %c0_18 = arith.constant 0 : index
    %c0_19 = arith.constant 0 : index
    %19 = vector.load %arg2[%c0_18, %c0_19] : memref<54x16xf32, #tpu.memory_space<vmem>>, vector<54x16xf32>
    %cst = arith.constant dense<0.000000e+00> : vector<80x16xf32>
    %20 = tpu.matmul %18, %19, %cst {dimension_numbers = #tpu.dot_dimension_numbers<[1], [0], [0], [1], [0, 0, 1, 1], [], []>} : vector<80x54xf32>, vector<54x16xf32>, vector<80x16xf32> -> vector<80x16xf32>
    %c0_20 = arith.constant 0 : index
    %c0_21 = arith.constant 0 : index
    %21 = vector.load %arg3[%c0_20, %c0_21] : memref<1x16xf32, #tpu.memory_space<vmem>>, vector<1x16xf32>
    %22 = vector.broadcast %21 : vector<1x16xf32> to vector<80x16xf32>
    %23 = arith.addf %20, %22 : vector<80x16xf32>
    %cst_22 = arith.constant 0.000000e+00 : f32
    %24 = vector.broadcast %cst_22 : f32 to vector<80x16xf32>
    %25 = arith.maximumf %23, %24 : vector<80x16xf32>
    %c0_23 = arith.constant 0 : index
    %c0_24 = arith.constant 0 : index
    %26 = vector.load %arg4[%c0_23, %c0_24] : memref<80x1xf32, #tpu.memory_space<vmem>>, vector<80x1xf32>
    %27 = vector.broadcast %26 : vector<80x1xf32> to vector<80x16xf32>
    %28 = arith.mulf %25, %27 : vector<80x16xf32>
    %c0_25 = arith.constant 0 : index
    %c0_26 = arith.constant 0 : index
    %c0_27 = arith.constant 0 : index
    %29 = vector.load %arg5[%c0_25, %c0_26, %c0_27] : memref<1x80x16xf32, #tpu.memory_space<vmem>>, vector<1x80x16xf32>
    %30 = vector.shape_cast %29 : vector<1x80x16xf32> to vector<80x16xf32>
    %31 = vector.shape_cast %28 : vector<80x16xf32> to vector<1x80x16xf32>
    tpu.vector_store %arg5[%c0_25, %c0_26, %c0_27], %31 {strides = array<i32>} : memref<1x80x16xf32, #tpu.memory_space<vmem>>, vector<1x80x16xf32>,
    return
  }
  func.func @transform_0(%arg0: i32) -> (i32, i32, i32) {
    %c0_i32 = arith.constant 0 : i32
    %c0_i32_0 = arith.constant 0 : i32
    %c0_i32_1 = arith.constant 0 : i32
    return %arg0, %c0_i32, %c0_i32_0 : i32, i32, i32
  }
  func.func @transform_1(%arg0: i32) -> (i32, i32) {
    %c0_i32 = arith.constant 0 : i32
    %c0_i32_0 = arith.constant 0 : i32
    %c0_i32_1 = arith.constant 0 : i32
    return %c0_i32, %c0_i32_0 : i32, i32
  }
  func.func @transform_2(%arg0: i32) -> (i32, i32) {
    %c0_i32 = arith.constant 0 : i32
    %c0_i32_0 = arith.constant 0 : i32
    %c0_i32_1 = arith.constant 0 : i32
    return %c0_i32, %c0_i32_0 : i32, i32
  }
  func.func @transform_3(%arg0: i32) -> (i32, i32) {
    %c0_i32 = arith.constant 0 : i32
    %c0_i32_0 = arith.constant 0 : i32
    %c0_i32_1 = arith.constant 0 : i32
    return %c0_i32, %c0_i32_0 : i32, i32
  }
  func.func @transform_4(%arg0: i32) -> (i32, i32, i32) {
    %c0_i32 = arith.constant 0 : i32
    %c0_i32_0 = arith.constant 0 : i32
    %c0_i32_1 = arith.constant 0 : i32
    return %arg0, %c0_i32, %c0_i32_0 : i32, i32, i32
  }
}

</mosaic_0001>

<llo_original>
// kernel: tpu_custom_call.1
$region0: #{tpu_custom_call.1}
  #allocation0 [shape = 'u32[]', space=smem, size = 0x4, offset = 0x4, fixed_abs, tag = 'smem constant byte address 0x4 - core index']
  #allocation1 [shape = 'u32[144,128]{1,0:T(1,128)}', space=vmem, size = 0x12000, scoped, tag = 'internal scratch']
  %s0 = inlined_call_operand.vmem [shape: f32[2,102,6], index: 0, kind: input, shape index: {}]
  %s1 = inlined_call_operand.vmem [shape: f32[54,16], index: 1, kind: input, shape index: {}]
  %s2 = inlined_call_operand.vmem [shape: f32[1,16], index: 2, kind: input, shape index: {}]
  %s3 = inlined_call_operand.vmem [shape: f32[80,1], index: 3, kind: input, shape index: {}]
  %s4 = inlined_call_operand.vmem [shape: f32[2,80,16], index: 4, kind: output, shape index: {}]
  %s5 = sld [smem:[#allocation0]]
  $region49: #{tpu_custom_call.1} parent=0
    _
  %s7 = ssub.s32 1, %s5
  %s8 = scalar_select 0, %s7, %s5
  loop: start=0, step=1, limit=4
  $region2: #{tpu_custom_call.1} parent=0 // loop_pre_header
    _
  $region3: #{tpu_custom_call.1} parent=0 // loop_header
    %s10 = sphi 0, %s14
    %p11 = scmp.ge.s32.totalorder %s10, 4
    %s20 = sphi 0, %s22
    %s23 = sphi 0, %s20
    %s24 = sphi 0, %s23
    %s40 = sphi 0, %s24
    %s44 = sphi 0, %s44
    %s46 = sphi 0, %s44
    %s47 = sphi 0, %s46
    %s61 = sphi 0, %s47
    %s65 = sphi 0, %s65
    %s67 = sphi 0, %s65
    %s68 = sphi 0, %s67
    %s82 = sphi 0, %s68
    %s86 = sphi 0, %s86
    %s88 = sphi 0, %s86
    %s89 = sphi 0, %s88
    %s103 = sphi 0, %s89
    %s109 = sphi 0, %s111
    %s112 = sphi 0, %s109
    %s113 = sphi 0, %s112
    %s129 = sphi 0, %s113
  $region4: #{tpu_custom_call.1} parent=0 // loop_header_branch
    %13 = sbr.rel (%p11) target = $region8
  $region5: #{tpu_custom_call.1} parent=0 // loop_body
    %s15 = ssub.s32 %s10, 1
    %s16 = ssub.s32 %s10, 2
    %s17 = sadd.s32 %s10, 1
    %s18 = ssub.s32 %s10, %s17
    %p19 = scmp.eq.s32.totalorder %s18, 0
    %s21 = sadd.s32 %s20, 1
    %s22 = scalar_select %p19, %s20, %s21
    %p25 = pneg %p19
    %p26 = scmp.eq.s32.totalorder %s10, 1
    %p27 = por %p25, %p26
    %p28 = scmp.ne.s32.totalorder %s20, %s23
    %p29 = scmp.eq.s32.totalorder %s10, 0
    %p30 = por %p28, %p29
    %p31 = scmp.ne.s32.totalorder %s20, %s23
    %p32 = scmp.eq.s32.totalorder %s15, 1
    %p33 = por %p31, %p32
    %p34 = scmp.ne.s32.totalorder %s23, %s24
    %p35 = scmp.eq.s32.totalorder %s15, 0
    %p36 = por %p34, %p35
    %p37 = scmp.ne.s32.totalorder %s23, %s24
    %p38 = scmp.eq.s32.totalorder %s16, 1
    %p39 = por %p37, %p38
    %p41 = scmp.ne.s32.totalorder %s24, %s40
    %p42 = scmp.eq.s32.totalorder %s16, 0
    %p43 = por %p41, %p42
    %s45 = sadd.s32 %s44, 1
    %p48 = scmp.eq.s32.totalorder %s10, 1
    %p49 = scmp.ne.s32.totalorder %s44, %s46
    %p50 = scmp.eq.s32.totalorder %s10, 0
    %p51 = por %p49, %p50
    %p52 = scmp.ne.s32.totalorder %s44, %s46
    %p53 = scmp.eq.s32.totalorder %s15, 1
    %p54 = por %p52, %p53
    %p55 = scmp.ne.s32.totalorder %s46, %s47
    %p56 = scmp.eq.s32.totalorder %s15, 0
    %p57 = por %p55, %p56
    %p58 = scmp.ne.s32.totalorder %s46, %s47
    %p59 = scmp.eq.s32.totalorder %s16, 1
    %p60 = por %p58, %p59
    %p62 = scmp.ne.s32.totalorder %s47, %s61
    %p63 = scmp.eq.s32.totalorder %s16, 0
    %p64 = por %p62, %p63
    %s66 = sadd.s32 %s65, 1
    %p69 = scmp.eq.s32.totalorder %s10, 1
    %p70 = scmp.ne.s32.totalorder %s65, %s67
    %p71 = scmp.eq.s32.totalorder %s10, 0
    %p72 = por %p70, %p71
    %p73 = scmp.ne.s32.totalorder %s65, %s67
    %p74 = scmp.eq.s32.totalorder %s15, 1
    %p75 = por %p73, %p74
    %p76 = scmp.ne.s32.totalorder %s67, %s68
    %p77 = scmp.eq.s32.totalorder %s15, 0
    %p78 = por %p76, %p77
    %p79 = scmp.ne.s32.totalorder %s67, %s68
    %p80 = scmp.eq.s32.totalorder %s16, 1
    %p81 = por %p79, %p80
    %p83 = scmp.ne.s32.totalorder %s68, %s82
    %p84 = scmp.eq.s32.totalorder %s16, 0
    %p85 = por %p83, %p84
    %s87 = sadd.s32 %s86, 1
    %p90 = scmp.eq.s32.totalorder %s10, 1
    %p91 = scmp.ne.s32.totalorder %s86, %s88
    %p92 = scmp.eq.s32.totalorder %s10, 0
    %p93 = por %p91, %p92
    %p94 = scmp.ne.s32.totalorder %s86, %s88
    %p95 = scmp.eq.s32.totalorder %s15, 1
    %p96 = por %p94, %p95
    %p97 = scmp.ne.s32.totalorder %s88, %s89
    %p98 = scmp.eq.s32.totalorder %s15, 0
    %p99 = por %p97, %p98
    %p100 = scmp.ne.s32.totalorder %s88, %s89
    %p101 = scmp.eq.s32.totalorder %s16, 1
    %p102 = por %p100, %p101
    %p104 = scmp.ne.s32.totalorder %s89, %s103
    %p105 = scmp.eq.s32.totalorder %s16, 0
    %p106 = por %p104, %p105
    %s107 = ssub.s32 %s10, %s17
    %p108 = scmp.eq.s32.totalorder %s107, 0
    %s110 = sadd.s32 %s109, 1
    %s111 = scalar_select %p108, %s109, %s110
    %p114 = pneg %p108
    %p115 = scmp.eq.s32.totalorder %s10, 1
    %p116 = por %p114, %p115
    %p117 = scmp.ne.s32.totalorder %s109, %s112
    %p118 = scmp.eq.s32.totalorder %s10, 0
    %p119 = por %p117, %p118
    %p120 = scmp.ne.s32.totalorder %s109, %s112
    %p121 = scmp.eq.s32.totalorder %s15, 1
    %p122 = por %p120, %p121
    %p123 = scmp.ne.s32.totalorder %s112, %s113
    %p124 = scmp.eq.s32.totalorder %s15, 0
    %p125 = por %p123, %p124
    %p126 = scmp.ne.s32.totalorder %s112, %s113
    %p127 = scmp.eq.s32.totalorder %s16, 1
    %p128 = por %p126, %p127
    %p130 = scmp.ne.s32.totalorder %s113, %s129
    %p131 = scmp.eq.s32.totalorder %s16, 0
    %p132 = por %p130, %p131
    %p133 = scmp.le.s32.totalorder 1, %s10
    %p134 = scmp.lt.s32.totalorder %s10, 3
    %p135 = pnand %p133, %p134
    %p136 = pneg %p135
    // Predicated region
    $region9: #{tpu_custom_call.1} parent=5 // pred_check
      _
    $region10: #{tpu_custom_call.1} parent=5 // pred_check_branch
      %138 = sbr.rel (%p135) target = $region12
    $region11: #{tpu_custom_call.1} parent=5 // pred_region
      %s139 = ssub.s32 %s10, 1
      // Predicated region
      $region13: #{tpu_custom_call.1} parent=11 // pred_check
        %p140 = pneg %p57
      $region14: #{tpu_custom_call.1} parent=11 // pred_check_branch
        %142 = sbr.rel (%p140) target = $region16
      $region15: #{tpu_custom_call.1} parent=11 // pred_region
        _
      $region16: #{tpu_custom_call.1} parent=11 // pred_fallthru
        _
      // Predicated region
      $region17: #{tpu_custom_call.1} parent=11 // pred_check
        %p143 = pneg %p78
      $region18: #{tpu_custom_call.1} parent=11 // pred_check_branch
        %145 = sbr.rel (%p143) target = $region20
      $region19: #{tpu_custom_call.1} parent=11 // pred_region
        _
      $region20: #{tpu_custom_call.1} parent=11 // pred_fallthru
        _
      // Predicated region
      $region21: #{tpu_custom_call.1} parent=11 // pred_check
        %p146 = pneg %p99
      $region22: #{tpu_custom_call.1} parent=11 // pred_check_branch
        %148 = sbr.rel (%p146) target = $region24
      $region23: #{tpu_custom_call.1} parent=11 // pred_region
        _
      $region24: #{tpu_custom_call.1} parent=11 // pred_fallthru
        _
    $region12: #{tpu_custom_call.1} parent=5 // pred_fallthru
      _
    %p149 = scmp.lt.s32.totalorder %s10, 2
    // Predicated region
    $region25: #{tpu_custom_call.1} parent=5 // pred_check
      %p150 = pneg %p149
    $region26: #{tpu_custom_call.1} parent=5 // pred_check_branch
      %152 = sbr.rel (%p150) target = $region28
    $region27: #{tpu_custom_call.1} parent=5 // pred_region
      // Predicated region
      $region29: #{tpu_custom_call.1} parent=27 // pred_check
        %p153 = pneg %p30
      $region30: #{tpu_custom_call.1} parent=27 // pred_check_branch
        %155 = sbr.rel (%p153) target = $region32
      $region31: #{tpu_custom_call.1} parent=27 // pred_region
        %p156 = scmp.lt.s32.totalorder %s10, 1
        %s157 = scalar_select %p156, %s10, 1
        %s158 = smul.addr %s157, 13
        %s159 = smul.addr %s158, 8
        %s160 = scalar_lea.vmem %s0, %s159
      $region32: #{tpu_custom_call.1} parent=27 // pred_fallthru
        _
    $region28: #{tpu_custom_call.1} parent=5 // pred_fallthru
      _
    %p161 = scmp.le.s32.totalorder 1, %s10
    %p162 = scmp.lt.s32.totalorder %s10, 3
    %p163 = pnand %p161, %p162
    %p164 = pneg %p163
    // Predicated region
    $region33: #{tpu_custom_call.1} parent=5 // pred_check
      _
    $region34: #{tpu_custom_call.1} parent=5 // pred_check_branch
      %166 = sbr.rel (%p163) target = $region36
    $region35: #{tpu_custom_call.1} parent=5 // pred_region
      %s167 = ssub.s32 %s10, 1
      %p168 = scmp.lt.s32.totalorder %s15, 1
      %s169 = scalar_select %p168, %s15, 1
      %s170 = smul.addr %s169, 13
      %s171 = smul.addr %s170, 8
      %s172 = scalar_lea.vmem %s0, %s171
      %p173 = pneg %p36
      %p174 = pneg %p33
      %p175 = pneg %p57
      %p176 = pneg %p54
      %p177 = pneg %p78
      %p178 = pneg %p75
      %p179 = pneg %p99
      %p180 = pneg %p96
      %p181 = pneg %p125
      %p182 = pneg %p122
      %p183 = scmp.lt.s32.totalorder %s15, 1
      %s184 = scalar_select %p183, %s15, 1
      %s185 = smul.addr %s184, 10
      %s186 = smul.addr %s185, 8
      %s187 = scalar_lea.vmem %s4, %s186
      %p188 = scmp.lt.s32.totalorder %s15, 1
      %s189 = scalar_select %p188, %s15, 1
      %s190 = smul.addr %s189, 13
      %s191 = smul.addr %s190, 8
      %s192 = scalar_lea.vmem %s0, %s191
      %p193 = scmp.lt.s32.totalorder %s15, 1
      %s194 = scalar_select %p193, %s15, 1
      %s195 = smul.addr %s194, 10
      %s196 = smul.addr %s195, 8
      %s197 = scalar_lea.vmem %s4, %s196
      %v198 = vld [vmem:[%s192] sm:$0xff]
      %v199 = vld [vmem:[%s192 + $0x8] sm:$0xff]
      %v200 = vld [vmem:[%s192 + $0x10] sm:$0xff]
      %v201 = vld [vmem:[%s192 + $0x18] sm:$0xff]
      %v202 = vld [vmem:[%s192 + $0x20] sm:$0xff]
      %v203 = vld [vmem:[%s192 + $0x28] sm:$0xff]
      %v204 = vld [vmem:[%s192 + $0x30] sm:$0xff]
      %v205 = vld [vmem:[%s192 + $0x38] sm:$0xff]
      %v206 = vld [vmem:[%s192 + $0x40] sm:$0xff]
      %v207 = vld [vmem:[%s192 + $0x48] sm:$0xff]
      %v208 = vld [vmem:[%s192 + $0x1] sm:$0xff]
      %v209 = vld [vmem:[%s192 + $0x9] sm:$0xff]
      %v210 = vld [vmem:[%s192 + $0x11] sm:$0xff]
      %v211 = vld [vmem:[%s192 + $0x19] sm:$0xff]
      %v212 = vld [vmem:[%s192 + $0x21] sm:$0xff]
      %v213 = vld [vmem:[%s192 + $0x29] sm:$0xff]
      %v214 = vld [vmem:[%s192 + $0x31] sm:$0xff]
      %v215 = vld [vmem:[%s192 + $0x39] sm:$0xff]
      %v216 = vld [vmem:[%s192 + $0x41] sm:$0xff]
      %v217 = vld [vmem:[%s192 + $0x49] sm:$0xff]
      %v218 = vld [vmem:[%s192 + $0x2] sm:$0xff]
      %v219 = vld [vmem:[%s192 + $0xa] sm:$0xff]
      %v220 = vld [vmem:[%s192 + $0x12] sm:$0xff]
      %v221 = vld [vmem:[%s192 + $0x1a] sm:$0xff]
      %v222 = vld [vmem:[%s192 + $0x22] sm:$0xff]
      %v223 = vld [vmem:[%s192 + $0x2a] sm:$0xff]
      %v224 = vld [vmem:[%s192 + $0x32] sm:$0xff]
      %v225 = vld [vmem:[%s192 + $0x3a] sm:$0xff]
      %v226 = vld [vmem:[%s192 + $0x42] sm:$0xff]
      %v227 = vld [vmem:[%s192 + $0x4a] sm:$0xff]
      %v228 = vld [vmem:[%s192 + $0x52] sm:$0xff]
      %v229 = vld [vmem:[%s192 + $0xb] sm:$0xff]
      %v230 = vld [vmem:[%s192 + $0x13] sm:$0xff]
      %v231 = vld [vmem:[%s192 + $0x1b] sm:$0xff]
      %v232 = vld [vmem:[%s192 + $0x23] sm:$0xff]
      %v233 = vld [vmem:[%s192 + $0x2b] sm:$0xff]
      %v234 = vld [vmem:[%s192 + $0x33] sm:$0xff]
      %v235 = vld [vmem:[%s192 + $0x3b] sm:$0xff]
      %v236 = vld [vmem:[%s192 + $0x43] sm:$0xff]
      %v237 = vld [vmem:[%s192 + $0x4b] sm:$0xff]
      %v238 = vld [vmem:[%s192 + $0x53] sm:$0xff]
      %v239 = vld [vmem:[%s192 + $0xc] sm:$0xff]
      %v240 = vld [vmem:[%s192 + $0x14] sm:$0xff]
      %v241 = vld [vmem:[%s192 + $0x1c] sm:$0xff]
      %v242 = vld [vmem:[%s192 + $0x24] sm:$0xff]
      %v243 = vld [vmem:[%s192 + $0x2c] sm:$0xff]
      %v244 = vld [vmem:[%s192 + $0x34] sm:$0xff]
      %v245 = vld [vmem:[%s192 + $0x3c] sm:$0xff]
      %v246 = vld [vmem:[%s192 + $0x44] sm:$0xff]
      %v247 = vld [vmem:[%s192 + $0x4c] sm:$0xff]
      %v248 = vld [vmem:[%s192 + $0x54] sm:$0xff]
      %v249 = vld [vmem:[%s192 + $0x5c] sm:$0xff]
      %v250 = vld [vmem:[%s192 + $0x15] sm:$0xff]
      %v251 = vld [vmem:[%s192 + $0x1d] sm:$0xff]
      %v252 = vld [vmem:[%s192 + $0x25] sm:$0xff]
      %v253 = vld [vmem:[%s192 + $0x2d] sm:$0xff]
      %v254 = vld [vmem:[%s192 + $0x35] sm:$0xff]
      %v255 = vld [vmem:[%s192 + $0x3d] sm:$0xff]
      %v256 = vld [vmem:[%s192 + $0x45] sm:$0xff]
      %v257 = vld [vmem:[%s192 + $0x4d] sm:$0xff]
      %v258 = vld [vmem:[%s192 + $0x55] sm:$0xff]
      %v259 = vld [vmem:[%s192 + $0x5d] sm:$0xff]
      %v260 = vld [vmem:[%s192 + $0x16] sm:$0xff]
      %v261 = vld [vmem:[%s192 + $0x1e] sm:$0xff]
      %v262 = vld [vmem:[%s192 + $0x26] sm:$0xff]
      %v263 = vld [vmem:[%s192 + $0x2e] sm:$0xff]
      %v264 = vld [vmem:[%s192 + $0x36] sm:$0xff]
      %v265 = vld [vmem:[%s192 + $0x3e] sm:$0xff]
      %v266 = vld [vmem:[%s192 + $0x46] sm:$0xff]
      %v267 = vld [vmem:[%s192 + $0x4e] sm:$0xff]
      %v268 = vld [vmem:[%s192 + $0x56] sm:$0xff]
      %v269 = vld [vmem:[%s192 + $0x5e] sm:$0xff]
      %280 = vrot.lane.b32.xlu0 %v208, 6
      %v281 = vpop.permute.xlu0 %280
      %282 = vrot.lane.b32.xlu0 %v209, 6
      %v283 = vpop.permute.xlu0 %282
      %284 = vrot.lane.b32.xlu0 %v210, 6
      %v285 = vpop.permute.xlu0 %284
      %286 = vrot.lane.b32.xlu0 %v211, 6
      %v287 = vpop.permute.xlu0 %286
      %288 = vrot.lane.b32.xlu0 %v212, 6
      %v289 = vpop.permute.xlu0 %288
      %290 = vrot.lane.b32.xlu0 %v213, 6
      %v291 = vpop.permute.xlu0 %290
      %292 = vrot.lane.b32.xlu0 %v214, 6
      %v293 = vpop.permute.xlu0 %292
      %294 = vrot.lane.b32.xlu0 %v215, 6
      %v295 = vpop.permute.xlu0 %294
      %296 = vrot.lane.b32.xlu0 %v216, 6
      %v297 = vpop.permute.xlu0 %296
      %298 = vrot.lane.b32.xlu0 %v217, 6
      %v299 = vpop.permute.xlu0 %298
      %320 = vrot.lane.b32.xlu0 %v218, 12
      %v321 = vpop.permute.xlu0 %320
      %322 = vrot.lane.b32.xlu0 %v219, 12
      %v323 = vpop.permute.xlu0 %322
      %324 = vrot.lane.b32.xlu0 %v220, 12
      %v325 = vpop.permute.xlu0 %324
      %326 = vrot.lane.b32.xlu0 %v221, 12
      %v327 = vpop.permute.xlu0 %326
      %328 = vrot.lane.b32.xlu0 %v222, 12
      %v329 = vpop.permute.xlu0 %328
      %330 = vrot.lane.b32.xlu0 %v223, 12
      %v331 = vpop.permute.xlu0 %330
      %332 = vrot.lane.b32.xlu0 %v224, 12
      %v333 = vpop.permute.xlu0 %332
      %334 = vrot.lane.b32.xlu0 %v225, 12
      %v335 = vpop.permute.xlu0 %334
      %336 = vrot.lane.b32.xlu0 %v226, 12
      %v337 = vpop.permute.xlu0 %336
      %338 = vrot.lane.b32.xlu0 %v227, 12
      %v339 = vpop.permute.xlu0 %338
      %351 = vrot.lane.b32.xlu0 %v219, 18
      %v352 = vpop.permute.xlu0 %351
      %353 = vrot.lane.b32.xlu0 %v220, 18
      %v354 = vpop.permute.xlu0 %353
      %355 = vrot.lane.b32.xlu0 %v221, 18
      %v356 = vpop.permute.xlu0 %355
      %357 = vrot.lane.b32.xlu0 %v222, 18
      %v358 = vpop.permute.xlu0 %357
      %359 = vrot.lane.b32.xlu0 %v223, 18
      %v360 = vpop.permute.xlu0 %359
      %361 = vrot.lane.b32.xlu0 %v224, 18
      %v362 = vpop.permute.xlu0 %361
      %363 = vrot.lane.b32.xlu0 %v225, 18
      %v364 = vpop.permute.xlu0 %363
      %365 = vrot.lane.b32.xlu0 %v226, 18
      %v366 = vpop.permute.xlu0 %365
      %367 = vrot.lane.b32.xlu0 %v227, 18
      %v368 = vpop.permute.xlu0 %367
      %369 = vrot.lane.b32.xlu0 %v228, 18
      %v370 = vpop.permute.xlu0 %369
      %391 = vrot.lane.b32.xlu0 %v229, 24
      %v392 = vpop.permute.xlu0 %391
      %393 = vrot.lane.b32.xlu0 %v230, 24
      %v394 = vpop.permute.xlu0 %393
      %395 = vrot.lane.b32.xlu0 %v231, 24
      %v396 = vpop.permute.xlu0 %395
      %397 = vrot.lane.b32.xlu0 %v232, 24
      %v398 = vpop.permute.xlu0 %397
      %399 = vrot.lane.b32.xlu0 %v233, 24
      %v400 = vpop.permute.xlu0 %399
      %401 = vrot.lane.b32.xlu0 %v234, 24
      %v402 = vpop.permute.xlu0 %401
      %403 = vrot.lane.b32.xlu0 %v235, 24
      %v404 = vpop.permute.xlu0 %403
      %405 = vrot.lane.b32.xlu0 %v236, 24
      %v406 = vpop.permute.xlu0 %405
      %407 = vrot.lane.b32.xlu0 %v237, 24
      %v408 = vpop.permute.xlu0 %407
      %409 = vrot.lane.b32.xlu0 %v238, 24
      %v410 = vpop.permute.xlu0 %409
      %431 = vrot.lane.b32.xlu0 %v239, 30
      %v432 = vpop.permute.xlu0 %431
      %433 = vrot.lane.b32.xlu0 %v240, 30
      %v434 = vpop.permute.xlu0 %433
      %435 = vrot.lane.b32.xlu0 %v241, 30
      %v436 = vpop.permute.xlu0 %435
      %437 = vrot.lane.b32.xlu0 %v242, 30
      %v438 = vpop.permute.xlu0 %437
      %439 = vrot.lane.b32.xlu0 %v243, 30
      %v440 = vpop.permute.xlu0 %439
      %441 = vrot.lane.b32.xlu0 %v244, 30
      %v442 = vpop.permute.xlu0 %441
      %443 = vrot.lane.b32.xlu0 %v245, 30
      %v444 = vpop.permute.xlu0 %443
      %445 = vrot.lane.b32.xlu0 %v246, 30
      %v446 = vpop.permute.xlu0 %445
      %447 = vrot.lane.b32.xlu0 %v247, 30
      %v448 = vpop.permute.xlu0 %447
      %449 = vrot.lane.b32.xlu0 %v248, 30
      %v450 = vpop.permute.xlu0 %449
      %462 = vrot.lane.b32.xlu0 %v240, 36
      %v463 = vpop.permute.xlu0 %462
      %464 = vrot.lane.b32.xlu0 %v241, 36
      %v465 = vpop.permute.xlu0 %464
      %466 = vrot.lane.b32.xlu0 %v242, 36
      %v467 = vpop.permute.xlu0 %466
      %468 = vrot.lane.b32.xlu0 %v243, 36
      %v469 = vpop.permute.xlu0 %468
      %470 = vrot.lane.b32.xlu0 %v244, 36
      %v471 = vpop.permute.xlu0 %470
      %472 = vrot.lane.b32.xlu0 %v245, 36
      %v473 = vpop.permute.xlu0 %472
      %474 = vrot.lane.b32.xlu0 %v246, 36
      %v475 = vpop.permute.xlu0 %474
      %476 = vrot.lane.b32.xlu0 %v247, 36
      %v477 = vpop.permute.xlu0 %476
      %478 = vrot.lane.b32.xlu0 %v248, 36
      %v479 = vpop.permute.xlu0 %478
      %480 = vrot.lane.b32.xlu0 %v249, 36
      %v481 = vpop.permute.xlu0 %480
      %502 = vrot.lane.b32.xlu0 %v250, 42
      %v503 = vpop.permute.xlu0 %502
      %504 = vrot.lane.b32.xlu0 %v251, 42
      %v505 = vpop.permute.xlu0 %504
      %506 = vrot.lane.b32.xlu0 %v252, 42
      %v507 = vpop.permute.xlu0 %506
      %508 = vrot.lane.b32.xlu0 %v253, 42
      %v509 = vpop.permute.xlu0 %508
      %510 = vrot.lane.b32.xlu0 %v254, 42
      %v511 = vpop.permute.xlu0 %510
      %512 = vrot.lane.b32.xlu0 %v255, 42
      %v513 = vpop.permute.xlu0 %512
      %514 = vrot.lane.b32.xlu0 %v256, 42
      %v515 = vpop.permute.xlu0 %514
      %516 = vrot.lane.b32.xlu0 %v257, 42
      %v517 = vpop.permute.xlu0 %516
      %518 = vrot.lane.b32.xlu0 %v258, 42
      %v519 = vpop.permute.xlu0 %518
      %520 = vrot.lane.b32.xlu0 %v259, 42
      %v521 = vpop.permute.xlu0 %520
      %542 = vrot.lane.b32.xlu0 %v260, 48
      %v543 = vpop.permute.xlu0 %542
      %544 = vrot.lane.b32.xlu0 %v261, 48
      %v545 = vpop.permute.xlu0 %544
      %546 = vrot.lane.b32.xlu0 %v262, 48
      %v547 = vpop.permute.xlu0 %546
      %548 = vrot.lane.b32.xlu0 %v263, 48
      %v549 = vpop.permute.xlu0 %548
      %550 = vrot.lane.b32.xlu0 %v264, 48
      %v551 = vpop.permute.xlu0 %550
      %552 = vrot.lane.b32.xlu0 %v265, 48
      %v553 = vpop.permute.xlu0 %552
      %554 = vrot.lane.b32.xlu0 %v266, 48
      %v555 = vpop.permute.xlu0 %554
      %556 = vrot.lane.b32.xlu0 %v267, 48
      %v557 = vpop.permute.xlu0 %556
      %558 = vrot.lane.b32.xlu0 %v268, 48
      %v559 = vpop.permute.xlu0 %558
      %560 = vrot.lane.b32.xlu0 %v269, 48
      %v561 = vpop.permute.xlu0 %560
      %vm572 = vcmask 48128
      %v573 = vsel %vm572, %v198, %v281
      %v574 = vsel %vm572, %v199, %v283
      %v575 = vsel %vm572, %v200, %v285
      %v576 = vsel %vm572, %v201, %v287
      %v577 = vsel %vm572, %v202, %v289
      %v578 = vsel %vm572, %v203, %v291
      %v579 = vsel %vm572, %v204, %v293
      %v580 = vsel %vm572, %v205, %v295
      %v581 = vsel %vm572, %v206, %v297
      %v582 = vsel %vm572, %v207, %v299
      %vm583 = vcmask 97280
      %v584 = vsel %vm583, %v573, %v321
      %v585 = vsel %vm583, %v574, %v323
      %v586 = vsel %vm583, %v575, %v325
      %v587 = vsel %vm583, %v576, %v327
      %v588 = vsel %vm583, %v577, %v329
      %v589 = vsel %vm583, %v578, %v331
      %v590 = vsel %vm583, %v579, %v333
      %v591 = vsel %vm583, %v580, %v335
      %v592 = vsel %vm583, %v581, %v337
      %v593 = vsel %vm583, %v582, %v339
      %vm594 = vcmask 146432
      %v595 = vsel %vm594, %v584, %v352
      %v596 = vsel %vm594, %v585, %v354
      %v597 = vsel %vm594, %v586, %v356
      %v598 = vsel %vm594, %v587, %v358
      %v599 = vsel %vm594, %v588, %v360
      %v600 = vsel %vm594, %v589, %v362
      %v601 = vsel %vm594, %v590, %v364
      %v602 = vsel %vm594, %v591, %v366
      %v603 = vsel %vm594, %v592, %v368
      %v604 = vsel %vm594, %v593, %v370
      %vm605 = vcmask 195584
      %v606 = vsel %vm605, %v595, %v392
      %v607 = vsel %vm605, %v596, %v394
      %v608 = vsel %vm605, %v597, %v396
      %v609 = vsel %vm605, %v598, %v398
      %v610 = vsel %vm605, %v599, %v400
      %v611 = vsel %vm605, %v600, %v402
      %v612 = vsel %vm605, %v601, %v404
      %v613 = vsel %vm605, %v602, %v406
      %v614 = vsel %vm605, %v603, %v408
      %v615 = vsel %vm605, %v604, %v410
      %vm616 = vcmask 244736
      %v617 = vsel %vm616, %v606, %v432
      %v618 = vsel %vm616, %v607, %v434
      %v619 = vsel %vm616, %v608, %v436
      %v620 = vsel %vm616, %v609, %v438
      %v621 = vsel %vm616, %v610, %v440
      %v622 = vsel %vm616, %v611, %v442
      %v623 = vsel %vm616, %v612, %v444
      %v624 = vsel %vm616, %v613, %v446
      %v625 = vsel %vm616, %v614, %v448
      %v626 = vsel %vm616, %v615, %v450
      %vm627 = vcmask 293888
      %v628 = vsel %vm627, %v617, %v463
      %v629 = vsel %vm627, %v618, %v465
      %v630 = vsel %vm627, %v619, %v467
      %v631 = vsel %vm627, %v620, %v469
      %v632 = vsel %vm627, %v621, %v471
      %v633 = vsel %vm627, %v622, %v473
      %v634 = vsel %vm627, %v623, %v475
      %v635 = vsel %vm627, %v624, %v477
      %v636 = vsel %vm627, %v625, %v479
      %v637 = vsel %vm627, %v626, %v481
      %vm638 = vcmask 343040
      %v639 = vsel %vm638, %v628, %v503
      %v640 = vsel %vm638, %v629, %v505
      %v641 = vsel %vm638, %v630, %v507
      %v642 = vsel %vm638, %v631, %v509
      %v643 = vsel %vm638, %v632, %v511
      %v644 = vsel %vm638, %v633, %v513
      %v645 = vsel %vm638, %v634, %v515
      %v646 = vsel %vm638, %v635, %v517
      %v647 = vsel %vm638, %v636, %v519
      %v648 = vsel %vm638, %v637, %v521
      %vm649 = vcmask 392192
      %v650 = vsel %vm649, %v639, %v543
      %v651 = vsel %vm649, %v640, %v545
      %v652 = vsel %vm649, %v641, %v547
      %v653 = vsel %vm649, %v642, %v549
      %v654 = vsel %vm649, %v643, %v551
      %v655 = vsel %vm649, %v644, %v553
      %v656 = vsel %vm649, %v645, %v555
      %v657 = vsel %vm649, %v646, %v557
      %v658 = vsel %vm649, %v647, %v559
      %v659 = vsel %vm649, %v648, %v561
      %v660 = vld [vmem:[%s1] sm:$0xff]
      %v661 = vld [vmem:[%s1 + $0x8] sm:$0xff]
      %v662 = vld [vmem:[%s1 + $0x10] sm:$0xff]
      %v663 = vld [vmem:[%s1 + $0x18] sm:$0xff]
      %v664 = vld [vmem:[%s1 + $0x20] sm:$0xff]
      %v665 = vld [vmem:[%s1 + $0x28] sm:$0xff]
      %v666 = vld [vmem:[%s1 + $0x30] sm:$0x3f]
      %v667 = vld [vmem:[%s2] sm:$0x1]
      %v669 = vlaneseq
      %v670 = vshrl.u32 %v669, 7
      %v671 = vsub.s32 0, %v670
      %v672 = vrot.slane %v667, %v671
      %vm674 = vcmask 441344
      %v676 = vsel %vm674, %v650, 0
      %v679 = vsel %vm674, %v651, 0
      %v682 = vsel %vm674, %v652, 0
      %v685 = vsel %vm674, %v653, 0
      %v688 = vsel %vm674, %v654, 0
      %v691 = vsel %vm674, %v655, 0
      %v694 = vsel %vm674, %v656, 0
      %v697 = vsel %vm674, %v657, 0
      %v700 = vsel %vm674, %v658, 0
      %v703 = vsel %vm674, %v659, 0
      %vm705 = vcmask 1045504
      %v707 = vsel %vm705, %v666, 0
      %709 = vmatprep.subr.mxu0 0.0
      %710 = vmatpush1.msra.mxu0 %v660
      %711 = vmatprep.subr.mxu0 0.0
      %712 = vmatpush1.msra.mxu0 %v661
      %713 = vmatprep.subr.mxu0 0.0
      %714 = vmatpush1.msra.mxu0 %v662
      %715 = vmatprep.subr.mxu0 0.0
      %716 = vmatpush1.msra.mxu0 %v663
      %717 = vmatprep.subr.mxu0 0.0
      %718 = vmatpush1.msra.mxu0 %v664
      %719 = vmatprep.subr.mxu0 0.0
      %720 = vmatpush1.msra.mxu0 %v665
      %721 = vmatprep.subr.mxu0 0.0
      %722 = vmatpush1.msra.mxu0 %v707
      %723 = vmatprep.subr.mxu0 0.0
      %724 = vmatpush1.msra.mxu0 0.0
      %725 = vmatprep.subr.mxu0 0.0
      %726 = vmatpush1.msra.mxu0 0.0
      %727 = vmatprep.subr.mxu0 0.0
      %728 = vmatpush1.msra.mxu0 0.0
      %729 = vmatprep.subr.mxu0 0.0
      %730 = vmatpush1.msra.mxu0 0.0
      %731 = vmatprep.subr.mxu0 0.0
      %732 = vmatpush1.msra.mxu0 0.0
      %733 = vmatprep.subr.mxu0 0.0
      %734 = vmatpush1.msra.mxu0 0.0
      %735 = vmatprep.subr.mxu0 0.0
      %736 = vmatpush1.msra.mxu0 0.0
      %737 = vmatprep.subr.mxu0 0.0
      %738 = vmatpush1.msra.mxu0 0.0
      %739 = vmatprep.subr.mxu0 0.0
      %740 = vmatpush1.msra.mxu0 0.0
      %741 = vmatprep.subr.mxu0 0.0
      %742 = vmatpush1.msra.mxu0 0.0
      %743 = vmatprep.subr.mxu0 0.0
      %744 = vmatpush1.msra.mxu0 0.0
      %745 = vmatprep.subr.mxu0 0.0
      %746 = vmatpush1.msra.mxu0 0.0
      %747 = vmatprep.subr.mxu0 0.0
      %748 = vmatpush1.msra.mxu0 0.0
      %749 = vmatprep.subr.mxu0 0.0
      %750 = vmatpush1.msra.mxu0 0.0
      %751 = vmatprep.subr.mxu0 0.0
      %752 = vmatpush1.msra.mxu0 0.0
      %753 = vmatprep.subr.mxu0 0.0
      %754 = vmatpush1.msra.mxu0 0.0
      %755 = vmatprep.subr.mxu0 0.0
      %756 = vmatpush1.msra.mxu0 0.0
      %757 = vmatprep.subr.mxu0 0.0
      %758 = vmatpush1.msra.mxu0 0.0
      %759 = vmatprep.subr.mxu0 0.0
      %760 = vmatpush1.msra.mxu0 0.0
      %761 = vmatprep.subr.mxu0 0.0
      %762 = vmatpush1.msra.mxu0 0.0
      %763 = vmatprep.subr.mxu0 0.0
      %764 = vmatpush1.msra.mxu0 0.0
      %765 = vmatprep.subr.mxu0 0.0
      %766 = vmatpush1.msra.mxu0 0.0
      %767 = vmatprep.subr.mxu0 0.0
      %768 = vmatpush1.msra.mxu0 0.0
      %769 = vmatprep.subr.mxu0 0.0
      %770 = vmatpush1.msra.mxu0 0.0
      %771 = vmatprep.subr.mxu0 0.0
      %772 = vmatpush1.msra.mxu0 0.0
      %773 = vmatprep.mubr.f32.mxu0 0.0
      %774 = vmatmul.mubr.f32.gmra.mrb[0].mxu0 %v676
      %v775 = vpop.f32.mrb[0].mxu0
      %v776 = vadd.f32 %v672, %v775
      %v777 = vpop.f32.mrb[0].mxu0
      %778 = vmatprep.mubr.f32.mxu0 0.0
      %779 = vmatmul.mubr.f32.gmra.mrb[0].mxu0 %v679
      %v780 = vpop.f32.mrb[0].mxu0
      %v781 = vadd.f32 %v672, %v780
      %v782 = vpop.f32.mrb[0].mxu0
      %783 = vmatprep.mubr.f32.mxu0 0.0
      %784 = vmatmul.mubr.f32.gmra.mrb[0].mxu0 %v682
      %v785 = vpop.f32.mrb[0].mxu0
      %v786 = vadd.f32 %v672, %v785
      %v787 = vpop.f32.mrb[0].mxu0
      %788 = vmatprep.mubr.f32.mxu0 0.0
      %789 = vmatmul.mubr.f32.gmra.mrb[0].mxu0 %v685
      %v790 = vpop.f32.mrb[0].mxu0
      %v791 = vadd.f32 %v672, %v790
      %v792 = vpop.f32.mrb[0].mxu0
      %793 = vmatprep.mubr.f32.mxu0 0.0
      %794 = vmatmul.mubr.f32.gmra.mrb[0].mxu0 %v688
      %v795 = vpop.f32.mrb[0].mxu0
      %v796 = vadd.f32 %v672, %v795
      %v797 = vpop.f32.mrb[0].mxu0
      %798 = vmatprep.mubr.f32.mxu0 0.0
      %799 = vmatmul.mubr.f32.gmra.mrb[0].mxu0 %v691
      %v800 = vpop.f32.mrb[0].mxu0
      %v801 = vadd.f32 %v672, %v800
      %v802 = vpop.f32.mrb[0].mxu0
      %803 = vmatprep.mubr.f32.mxu0 0.0
      %804 = vmatmul.mubr.f32.gmra.mrb[0].mxu0 %v694
      %v805 = vpop.f32.mrb[0].mxu0
      %v806 = vadd.f32 %v672, %v805
      %v807 = vpop.f32.mrb[0].mxu0
      %808 = vmatprep.mubr.f32.mxu0 0.0
      %809 = vmatmul.mubr.f32.gmra.mrb[0].mxu0 %v697
      %v810 = vpop.f32.mrb[0].mxu0
      %v811 = vadd.f32 %v672, %v810
      %v812 = vpop.f32.mrb[0].mxu0
      %813 = vmatprep.mubr.f32.mxu0 0.0
      %814 = vmatmul.mubr.f32.gmra.mrb[0].mxu0 %v700
      %v815 = vpop.f32.mrb[0].mxu0
      %v816 = vadd.f32 %v672, %v815
      %v817 = vpop.f32.mrb[0].mxu0
      %818 = vmatprep.mubr.f32.mxu0 0.0
      %819 = vmatmul.mubr.f32.gmra.mrb[0].mxu0 %v703
      %v820 = vpop.f32.mrb[0].mxu0
      %v821 = vadd.f32 %v672, %v820
      %v822 = vpop.f32.mrb[0].mxu0
      %823 = vdwg.mxu0
      %v824 = vmax.f32 %v776, 0.0
      %v825 = vmax.f32 %v781, 0.0
      %v826 = vmax.f32 %v786, 0.0
      %v827 = vmax.f32 %v791, 0.0
      %v828 = vmax.f32 %v796, 0.0
      %v829 = vmax.f32 %v801, 0.0
      %v830 = vmax.f32 %v806, 0.0
      %v831 = vmax.f32 %v811, 0.0
      %v832 = vmax.f32 %v816, 0.0
      %v833 = vmax.f32 %v821, 0.0
      %v834 = vld [vmem:[%s3] sm:$0xff]
      %v835 = vld [vmem:[%s3 + $0x8] sm:$0xff]
      %v836 = vld [vmem:[%s3 + $0x10] sm:$0xff]
      %v837 = vld [vmem:[%s3 + $0x18] sm:$0xff]
      %v838 = vld [vmem:[%s3 + $0x20] sm:$0xff]
      %v839 = vld [vmem:[%s3 + $0x28] sm:$0xff]
      %v840 = vld [vmem:[%s3 + $0x30] sm:$0xff]
      %v841 = vld [vmem:[%s3 + $0x38] sm:$0xff]
      %v842 = vld [vmem:[%s3 + $0x40] sm:$0xff]
      %v843 = vld [vmem:[%s3 + $0x48] sm:$0xff]
      %845 = vset.pattern.permute.xlu0 0
      %846 = vperm.xlu0 %845, %v834
      %v847 = vpop.permute.xlu0 %846
      %850 = vset.pattern.permute.xlu0 0
      %851 = vperm.xlu0 %850, %v835
      %v852 = vpop.permute.xlu0 %851
      %855 = vset.pattern.permute.xlu0 0
      %856 = vperm.xlu0 %855, %v836
      %v857 = vpop.permute.xlu0 %856
      %860 = vset.pattern.permute.xlu0 0
      %861 = vperm.xlu0 %860, %v837
      %v862 = vpop.permute.xlu0 %861
      %865 = vset.pattern.permute.xlu0 0
      %866 = vperm.xlu0 %865, %v838
      %v867 = vpop.permute.xlu0 %866
      %870 = vset.pattern.permute.xlu0 0
      %871 = vperm.xlu0 %870, %v839
      %v872 = vpop.permute.xlu0 %871
      %875 = vset.pattern.permute.xlu0 0
      %876 = vperm.xlu0 %875, %v840
      %v877 = vpop.permute.xlu0 %876
      %880 = vset.pattern.permute.xlu0 0
      %881 = vperm.xlu0 %880, %v841
      %v882 = vpop.permute.xlu0 %881
      %885 = vset.pattern.permute.xlu0 0
      %886 = vperm.xlu0 %885, %v842
      %v887 = vpop.permute.xlu0 %886
      %890 = vset.pattern.permute.xlu0 0
      %891 = vperm.xlu0 %890, %v843
      %v892 = vpop.permute.xlu0 %891
      %v894 = vmul.f32 %v824, %v847
      %v895 = vmul.f32 %v825, %v852
      %v896 = vmul.f32 %v826, %v857
      %v897 = vmul.f32 %v827, %v862
      %v898 = vmul.f32 %v828, %v867
      %v899 = vmul.f32 %v829, %v872
      %v900 = vmul.f32 %v830, %v877
      %v901 = vmul.f32 %v831, %v882
      %v902 = vmul.f32 %v832, %v887
      %v903 = vmul.f32 %v833, %v892
      %vm904 = vcmask 130048
      %905 = vst.msk [vmem:[%s197] sm:$0xff] %vm904, %v894
      %906 = vst.msk [vmem:[%s197 + $0x8] sm:$0xff] %vm904, %v895
      %907 = vst.msk [vmem:[%s197 + $0x10] sm:$0xff] %vm904, %v896
      %908 = vst.msk [vmem:[%s197 + $0x18] sm:$0xff] %vm904, %v897
      %909 = vst.msk [vmem:[%s197 + $0x20] sm:$0xff] %vm904, %v898
      %910 = vst.msk [vmem:[%s197 + $0x28] sm:$0xff] %vm904, %v899
      %911 = vst.msk [vmem:[%s197 + $0x30] sm:$0xff] %vm904, %v900
      %912 = vst.msk [vmem:[%s197 + $0x38] sm:$0xff] %vm904, %v901
      %913 = vst.msk [vmem:[%s197 + $0x40] sm:$0xff] %vm904, %v902
      %914 = vst.msk [vmem:[%s197 + $0x48] sm:$0xff] %vm904, %v903
      %p915 = scmp.lt.s32.totalorder %s15, 1
      %s916 = scalar_select %p915, %s15, 1
      %s917 = smul.addr %s916, 10
      %s918 = smul.addr %s917, 8
      %s919 = scalar_lea.vmem %s4, %s918
      // Predicated region
      $region37: #{tpu_custom_call.1} parent=35 // pred_check
        %p920 = pneg %p122
      $region38: #{tpu_custom_call.1} parent=35 // pred_check_branch
        %922 = sbr.rel (%p920) target = $region40
      $region39: #{tpu_custom_call.1} parent=35 // pred_region
        _
      $region40: #{tpu_custom_call.1} parent=35 // pred_fallthru
        _
    $region36: #{tpu_custom_call.1} parent=5 // pred_fallthru
      _
    %p923 = scmp.le.s32.totalorder 2, %s10
    // Predicated region
    $region41: #{tpu_custom_call.1} parent=5 // pred_check
      %p924 = pneg %p923
    $region42: #{tpu_custom_call.1} parent=5 // pred_check_branch
      %926 = sbr.rel (%p924) target = $region44
    $region43: #{tpu_custom_call.1} parent=5 // pred_region
      %s927 = ssub.s32 %s10, 2
      // Predicated region
      $region45: #{tpu_custom_call.1} parent=43 // pred_check
        %p928 = pneg %p128
      $region46: #{tpu_custom_call.1} parent=43 // pred_check_branch
        %930 = sbr.rel (%p928) target = $region48
      $region47: #{tpu_custom_call.1} parent=43 // pred_region
        %p931 = scmp.lt.s32.totalorder %s16, 1
        %s932 = scalar_select %p931, %s16, 1
        %s933 = smul.addr %s932, 10
        %s934 = smul.addr %s933, 8
        %s935 = scalar_lea.vmem %s4, %s934
      $region48: #{tpu_custom_call.1} parent=43 // pred_fallthru
        _
    $region44: #{tpu_custom_call.1} parent=5 // pred_fallthru
      _
  $region6: #{tpu_custom_call.1} parent=0 // loop_footer
    %s14 = sadd.s32 1, %s10
  $region7: #{tpu_custom_call.1} parent=0 // loop_footer_branch
    %9 = sbr.rel target = $region3
  $region8: #{tpu_custom_call.1} parent=0 // loop_exit
    _

</llo_original>
